<compile_context>
chip_gen: v5e
topology: v5e:2x2
jax: 0.10.0
libtpu: 0.0.40
codegen_flags: <defaults>
</compile_context>

<pallas_src>
import jax
import jax.numpy as jnp
from jax.experimental import pallas as pl
from jax.experimental.pallas import tpu as pltpu


def _round_up(x, m):
    return ((x + m - 1) // m) * m


def gcn_mc_kernel(adj_ref, y_ref, xr_ref, o_ref):
    """Grid = (i: destination-row tiles [parallel], k: source tiles [reduction]).

    The f32 output tile is resident across k (constant-over-k index_map) and doubles
    as the accumulator; the epilogue applies ReLU + residual in place at k == last.
    """
    k = pl.program_id(1)

    @pl.when(k == 0)
    def _():
        o_ref[...] = jnp.zeros_like(o_ref)

    # int8 {0,1} adjacency -> bf16 on the VPU (otherwise-idle VALU slots), bf16 MXU
    # matmul, f32 accumulation into the resident output tile.
    o_ref[...] += jnp.dot(adj_ref[...].astype(jnp.bfloat16), y_ref[...],
                          preferred_element_type=jnp.float32)

    @pl.when(k == pl.num_programs(1) - 1)
    def _():
        # TODO(synk): nn.Dropout(0.3) is treated as eval-mode identity; training-mode
        # dropout would need pltpu.prng_seed / pltpu.prng_random_bits masking here.
        h = jnp.maximum(o_ref[...], 0.0)                    # ReLU
        o_ref[...] = xr_ref[...].astype(jnp.float32) + h    # residual


def gcn_mc_forward(adj, x, weight, *, tm=512, tk=2048):
    """adj: (N, N) dense 0/1 adjacency (row i = incoming edges of node i),
       x: (N, C) node features, weight: (C_out, C_in) PyTorch nn.Linear layout."""
    N, C = x.shape
    assert adj.shape == (N, N)
    assert weight.shape == (C, C), "residual=True requires in_channels == out_channels"

    LANE = 128
    SUB_I8 = 32                                       # int8 sublane packing
    Cp = _round_up(C, LANE)                           # lane-dense feature dim
    tm = min(_round_up(tm, SUB_I8), _round_up(N, SUB_I8))
    tk = min(_round_up(tk, LANE), _round_up(N, LANE))

    # Double-buffered VMEM footprint of one grid step; keep inside a v7x-safe budget.
    def footprint(tm_, tk_):
        return 2 * (tm_ * tk_              # int8 adjacency tile
                    + tk_ * Cp * 2         # bf16 Y tile
                    + tm_ * Cp * 2         # bf16 residual tile
                    + tm_ * Cp * 4)        # f32 output/accumulator tile

    VMEM_BUDGET = 40 << 20
    while footprint(tm, tk) > VMEM_BUDGET and tk > LANE:
        tk //= 2
    while footprint(tm, tk) > VMEM_BUDGET and tm > SUB_I8:
        tm //= 2

    Nd = _round_up(N, tm)                             # padded destination rows
    Ns = _round_up(N, tk)                             # padded source columns
    grid = (Nd // tm, Ns // tk)

    # Hoisted linear layer: A @ (X W^T) == (A @ X) @ W^T, so do X @ W^T once in plain
    # XLA and let the kernel stream only the dominant N^2 adjacency. bf16 feeds the MXU.
    y = jnp.dot(x, weight.T).astype(jnp.bfloat16)

    # Zero-padding: padded source nodes contribute nothing; padded destination rows are
    # sliced off. 0/1 adjacency is exact in int8. NOTE: for repeated layers/steps the
    # padded int8 adjacency should be built once outside and reused; inline here for a
    # self-contained single forward.
    adj_p = jnp.zeros((Nd, Ns), jnp.int8).at[:N, :N].set(adj.astype(jnp.int8))
    y_p = jnp.zeros((Ns, Cp), jnp.bfloat16).at[:N, :C].set(y)
    xr_p = jnp.zeros((Nd, Cp), jnp.bfloat16).at[:N, :C].set(x.astype(jnp.bfloat16))

    flops = 2 * Nd * Ns * Cp
    bytes_accessed = (adj_p.size                      # int8 adjacency, streamed once
                      + y_p.size * 2 * grid[0]        # bf16 Y re-streamed per row tile
                      + xr_p.size * 2                 # bf16 residual read
                      + Nd * Cp * 4)                  # f32 output write

    vmem_limit = min(max(footprint(tm, tk) + (8 << 20), 32 << 20), 48 << 20)

    out_p = pl.pallas_call(
        gcn_mc_kernel,
        out_shape=jax.ShapeDtypeStruct((Nd, Cp), jnp.float32),
        grid_spec=pltpu.PrefetchScalarGridSpec(
            num_scalar_prefetch=0,
            grid=grid,
            in_specs=[
                pl.BlockSpec((tm, tk), lambda i, k: (i, k)),   # int8 adjacency tile
                pl.BlockSpec((tk, Cp), lambda i, k: (k, 0)),   # bf16 Y = X W^T tile
                pl.BlockSpec((tm, Cp), lambda i, k: (i, 0)),   # bf16 residual, resident over k
            ],
            out_specs=pl.BlockSpec((tm, Cp), lambda i, k: (i, 0)),
        ),
        compiler_params=pltpu.CompilerParams(
            dimension_semantics=("parallel", "arbitrary"),
            vmem_limit_bytes=vmem_limit,
        ),
        cost_estimate=pl.CostEstimate(flops=flops, transcendentals=0,
                                      bytes_accessed=bytes_accessed),
    )(adj_p, y_p, xr_p)

    return out_p[:N, :C]


def gcn_mc_reference(adj, x, weight):
    agg = adj @ x
    h = agg @ weight.T
    h = jnp.maximum(h, 0.0)
    return x + h


def _make_inputs(key, n, c, p_edge=0.25):
    k_x, k_w, k_a = jax.random.split(key, 3)
    x = jax.random.normal(k_x, (n, c), dtype=jnp.float32)
    bound = 1.0 / jnp.sqrt(jnp.float32(c))
    weight = jax.random.uniform(k_w, (c, c), minval=-bound, maxval=bound,
                                dtype=jnp.float32)
    # deterministic sparse-ish adjacency (edge j -> i), no self loops, matching
    # DGL update_all(copy_src, reduce_sum) over incoming edges.
    adj = (jax.random.uniform(k_a, (n, n)) < p_edge).astype(jnp.float32)
    adj = adj * (1.0 - jnp.eye(n, dtype=jnp.float32))
    return adj, x, weight


if __name__ == "__main__":
    key = jax.random.PRNGKey(0)
    k1, k2 = jax.random.split(key)

    # Case 1: module-sized toy problem (N nodes, C in==out channels). Grid = (1, 1).
    adj, x, weight = _make_inputs(k1, n=16, c=32)
    out = jax.block_until_ready(gcn_mc_forward(adj, x, weight))
    ref = gcn_mc_reference(adj, x, weight)
    # bf16 Y / bf16 residual vs f32 reference -> loose-ish tolerance.
    assert jnp.allclose(out, ref, atol=3e-2, rtol=3e-2), "case 1 mismatch vs reference"

    # Case 2: exercise multi-tile grid (parallel row tiles + reduction accumulation).
    adj2, x2, weight2 = _make_inputs(k2, n=200, c=96)
    out2 = jax.block_until_ready(gcn_mc_forward(adj2, x2, weight2, tm=64, tk=128))
    ref2 = gcn_mc_reference(adj2, x2, weight2)
    assert jnp.allclose(out2, ref2, atol=5e-2, rtol=5e-2), "case 2 mismatch vs reference"

    print("KERNEL_OK")
</pallas_src>

<mosaic_0001>
module attributes {stable_mosaic.version = 11 : i64} {
  func.func @gcn_mc_kernel(%arg0: i32, %arg1: i32, %arg2: memref<32x128xi8, #tpu.memory_space<vmem>>, %arg3: memref<128x128xbf16, #tpu.memory_space<vmem>>, %arg4: memref<32x128xbf16, #tpu.memory_space<vmem>>, %arg5: memref<32x128xf32, #tpu.memory_space<vmem>>) attributes {dimension_semantics = [#tpu.dimension_semantics<parallel>, #tpu.dimension_semantics<arbitrary>], iteration_bounds = array<i64: 1, 1>, scalar_prefetch = 0 : i64, scratch_operands = 0 : i64, tpu.core_type = #tpu.core_type<tc>, window_params = [{transform_indices = @transform_0, window_bounds = array<i64: 32, 128>}, {transform_indices = @transform_1, window_bounds = array<i64: 128, 128>}, {transform_indices = @transform_2, window_bounds = array<i64: 32, 128>}, {transform_indices = @transform_3, window_bounds = array<i64: 32, 128>}]} {
    %c0_i32 = arith.constant 0 : i32
    %0 = arith.cmpi eq, %arg1, %c0_i32 : i32
    %1 = arith.extui %0 : i1 to i32
    %c0_i32_0 = arith.constant 0 : i32
    %2 = arith.cmpi ne, %1, %c0_i32_0 : i32
    scf.if %2 {
      %cst_10 = arith.constant 0.000000e+00 : f32
      %13 = vector.broadcast %cst_10 : f32 to vector<32x128xf32>
      %c0_11 = arith.constant 0 : index
      %c0_12 = arith.constant 0 : index
      %14 = vector.load %arg5[%c0_11, %c0_12] : memref<32x128xf32, #tpu.memory_space<vmem>>, vector<32x128xf32>
      tpu.vector_store %arg5[%c0_11, %c0_12], %13 {strides = array<i32>} : memref<32x128xf32, #tpu.memory_space<vmem>>, vector<32x128xf32>,
    } else {
    }
    %c0 = arith.constant 0 : index
    %c0_1 = arith.constant 0 : index
    %3 = vector.load %arg5[%c0, %c0_1] : memref<32x128xf32, #tpu.memory_space<vmem>>, vector<32x128xf32>
    %c0_2 = arith.constant 0 : index
    %c0_3 = arith.constant 0 : index
    %4 = vector.load %arg2[%c0_2, %c0_3] : memref<32x128xi8, #tpu.memory_space<vmem>>, vector<32x128xi8>
    %5 = arith.sitofp %4 : vector<32x128xi8> to vector<32x128xbf16>
    %c0_4 = arith.constant 0 : index
    %c0_5 = arith.constant 0 : index
    %6 = vector.load %arg3[%c0_4, %c0_5] : memref<128x128xbf16, #tpu.memory_space<vmem>>, vector<128x128xbf16>
    %cst = arith.constant dense<0.000000e+00> : vector<32x128xf32>
    %7 = tpu.matmul %5, %6, %cst {dimension_numbers = #tpu.dot_dimension_numbers<[1], [0], [0], [1], [0, 0, 1, 1], [], []>} : vector<32x128xbf16>, vector<128x128xbf16>, vector<32x128xf32> -> vector<32x128xf32>
    %8 = arith.addf %3, %7 : vector<32x128xf32>
    %c0_6 = arith.constant 0 : index
    %c0_7 = arith.constant 0 : index
    %9 = vector.load %arg5[%c0_6, %c0_7] : memref<32x128xf32, #tpu.memory_space<vmem>>, vector<32x128xf32>
    tpu.vector_store %arg5[%c0_6, %c0_7], %8 {strides = array<i32>} : memref<32x128xf32, #tpu.memory_space<vmem>>, vector<32x128xf32>,
    %c0_i32_8 = arith.constant 0 : i32
    %10 = arith.cmpi eq, %arg1, %c0_i32_8 : i32
    %11 = arith.extui %10 : i1 to i32
    %c0_i32_9 = arith.constant 0 : i32
    %12 = arith.cmpi ne, %11, %c0_i32_9 : i32
    scf.if %12 {
      %c0_10 = arith.constant 0 : index
      %c0_11 = arith.constant 0 : index
      %13 = vector.load %arg5[%c0_10, %c0_11] : memref<32x128xf32, #tpu.memory_space<vmem>>, vector<32x128xf32>
      %cst_12 = arith.constant 0.000000e+00 : f32
      %14 = vector.broadcast %cst_12 : f32 to vector<32x128xf32>
      %15 = arith.maximumf %13, %14 : vector<32x128xf32>
      %c0_13 = arith.constant 0 : index
      %c0_14 = arith.constant 0 : index
      %16 = vector.load %arg4[%c0_13, %c0_14] : memref<32x128xbf16, #tpu.memory_space<vmem>>, vector<32x128xbf16>
      %17 = arith.extf %16 : vector<32x128xbf16> to vector<32x128xf32>
      %18 = arith.addf %17, %15 : vector<32x128xf32>
      %c0_15 = arith.constant 0 : index
      %c0_16 = arith.constant 0 : index
      %19 = vector.load %arg5[%c0_15, %c0_16] : memref<32x128xf32, #tpu.memory_space<vmem>>, vector<32x128xf32>
      tpu.vector_store %arg5[%c0_15, %c0_16], %18 {strides = array<i32>} : memref<32x128xf32, #tpu.memory_space<vmem>>, vector<32x128xf32>,
    } else {
    }
    return
  }
  func.func @transform_0(%arg0: i32, %arg1: i32) -> (i32, i32) {
    %c0_i32 = arith.constant 0 : i32
    return %arg0, %arg1 : i32, i32
  }
  func.func @transform_1(%arg0: i32, %arg1: i32) -> (i32, i32) {
    %c0_i32 = arith.constant 0 : i32
    %c0_i32_0 = arith.constant 0 : i32
    return %arg1, %c0_i32 : i32, i32
  }
  func.func @transform_2(%arg0: i32, %arg1: i32) -> (i32, i32) {
    %c0_i32 = arith.constant 0 : i32
    %c0_i32_0 = arith.constant 0 : i32
    return %arg0, %c0_i32 : i32, i32
  }
  func.func @transform_3(%arg0: i32, %arg1: i32) -> (i32, i32) {
    %c0_i32 = arith.constant 0 : i32
    %c0_i32_0 = arith.constant 0 : i32
    return %arg0, %c0_i32 : i32, i32
  }
}

</mosaic_0001>

<llo_original>
// kernel: tpu_custom_call.1
$region0: #{tpu_custom_call.1}
  #allocation0 [shape = 'u32[]', space=smem, size = 0x4, offset = 0x4, fixed_abs, tag = 'smem constant byte address 0x4 - core index']
  #allocation1 [shape = 'u32[72,128]{1,0:T(1,128)}', space=vmem, size = 0x9000, scoped, tag = 'internal scratch']
  %s0 = inlined_call_operand.hbm [shape: s8[32,128], index: 0, kind: input, shape index: {}]
  %s1 = inlined_call_operand.hbm [shape: bf16[128,128], index: 1, kind: input, shape index: {}]
  %s2 = inlined_call_operand.hbm [shape: bf16[32,128], index: 2, kind: input, shape index: {}]
  %s3 = inlined_call_operand.hbm [shape: f32[32,128], index: 3, kind: output, shape index: {}]
  %s4 = sld [smem:[#allocation0]]
  $region42: #{tpu_custom_call.1} parent=0
    _
  %s6 = ssub.s32 1, %s4
  %s7 = scalar_select 0, %s6, %s4
  $region1: #{tpu_custom_call.1} parent=0
    #allocation2 [shape = 'u8[4096]{0}', space=vmem, size = 0x1000, scoped, tag = 'input window, operand 0, single buffered']
    #allocation3 [shape = 's32[1]{0}', space=sflag, size = 0x4, scoped, tag = 'scoped memory for tpu_custom_call.1']
    #allocation4 [shape = 's32[1]{0}', space=sflag, size = 0x4, scoped, tag = 'scoped memory for tpu_custom_call.1']
    #allocation5 [shape = 'u8[32768]{0}', space=vmem, size = 0x8000, scoped, tag = 'input window, operand 1, single buffered']
    #allocation6 [shape = 's32[1]{0}', space=sflag, size = 0x4, scoped, tag = 'scoped memory for tpu_custom_call.1']
    #allocation7 [shape = 'u8[8192]{0}', space=vmem, size = 0x2000, scoped, tag = 'input window, operand 2, single buffered']
    #allocation8 [shape = 'u8[16384]{0}', space=vmem, size = 0x4000, scoped, tag = 'output window, operand 0, single buffered']
    %8 = vsyncpa [#allocation3], 0
    %9 = vsyncpa [#allocation6], 0
    %10 = vsyncpa [#allocation4], 0
    // Predicated region
    $region2: #{tpu_custom_call.1} parent=1 // pred_check
      _
    $region3: #{tpu_custom_call.1} parent=1 // pred_check_branch
      %12 = sbr.rel (0) target = $region5
    $region4: #{tpu_custom_call.1} parent=1 // pred_region
      %14 = vsyncadd [#allocation3], 0
      %s16 = sshll.u32 %s0, 4
      %s17 = int_to_ptr.hbm [resolvable:$true] %s16
      %s18 = sshll.u32 [#allocation2], 4
      %s19 = int_to_ptr.vmem [resolvable:$true] %s18
      %21 = dma.hbm_to_vmem [thread:$0]  %s17, 128, %s19, [#allocation3]
    $region5: #{tpu_custom_call.1} parent=1 // pred_fallthru
      _
    // Predicated region
    $region6: #{tpu_custom_call.1} parent=1 // pred_check
      _
    $region7: #{tpu_custom_call.1} parent=1 // pred_check_branch
      %23 = sbr.rel (0) target = $region9
    $region8: #{tpu_custom_call.1} parent=1 // pred_region
      %25 = vsyncadd [#allocation6], 0
      %s26 = sshll.u32 %s1, 4
      %s27 = int_to_ptr.hbm [resolvable:$true] %s26
      %s28 = sshll.u32 [#allocation5], 4
      %s29 = int_to_ptr.vmem [resolvable:$true] %s28
      %34 = dma.hbm_to_vmem [thread:$0]  %s27, 1024, %s29, [#allocation6], 64, 64, 4
    $region9: #{tpu_custom_call.1} parent=1 // pred_fallthru
      _
    // Predicated region
    $region10: #{tpu_custom_call.1} parent=1 // pred_check
      _
    $region11: #{tpu_custom_call.1} parent=1 // pred_check_branch
      %36 = sbr.rel (0) target = $region13
    $region12: #{tpu_custom_call.1} parent=1 // pred_region
      %38 = vsyncadd [#allocation6], 0
      %s39 = sshll.u32 %s2, 4
      %s40 = int_to_ptr.hbm [resolvable:$true] %s39
      %s41 = sshll.u32 [#allocation7], 4
      %s42 = int_to_ptr.vmem [resolvable:$true] %s41
      %47 = dma.hbm_to_vmem [thread:$0]  %s40, 256, %s42, [#allocation6], 64, 64, 4
    $region13: #{tpu_custom_call.1} parent=1 // pred_fallthru
      _
    // Predicated region
    $region14: #{tpu_custom_call.1} parent=1 // pred_check
      _
    $region15: #{tpu_custom_call.1} parent=1 // pred_check_branch
      %49 = sbr.rel (0) target = $region17
    $region16: #{tpu_custom_call.1} parent=1 // pred_region
      %51 = dma.done [#allocation3], 128
    $region17: #{tpu_custom_call.1} parent=1 // pred_fallthru
      _
    // Predicated region
    $region18: #{tpu_custom_call.1} parent=1 // pred_check
      _
    $region19: #{tpu_custom_call.1} parent=1 // pred_check_branch
      %53 = sbr.rel (0) target = $region21
    $region20: #{tpu_custom_call.1} parent=1 // pred_region
      %55 = dma.done [#allocation6], 1024
    $region21: #{tpu_custom_call.1} parent=1 // pred_fallthru
      _
    // Predicated region
    $region22: #{tpu_custom_call.1} parent=1 // pred_check
      _
    $region23: #{tpu_custom_call.1} parent=1 // pred_check_branch
      %57 = sbr.rel (0) target = $region25
    $region24: #{tpu_custom_call.1} parent=1 // pred_region
      %59 = dma.done [#allocation6], 256
    $region25: #{tpu_custom_call.1} parent=1 // pred_fallthru
      _
    %p60 = scmp.eq.s32.totalorder 0, 0
    // Predicated region
    $region26: #{tpu_custom_call.1} parent=1 // pred_check
      %p61 = pneg %p60
    $region27: #{tpu_custom_call.1} parent=1 // pred_check_branch
      %63 = sbr.rel (%p61) target = $region29
    $region28: #{tpu_custom_call.1} parent=1 // pred_region
      %64 = vst [vmem:[#allocation8] sm:$0xff] 0.0
      %65 = vst [vmem:[#allocation8 + $0x8] sm:$0xff] 0.0
      %66 = vst [vmem:[#allocation8 + $0x10] sm:$0xff] 0.0
      %67 = vst [vmem:[#allocation8 + $0x18] sm:$0xff] 0.0
    $region29: #{tpu_custom_call.1} parent=1 // pred_fallthru
      _
    %v68 = vld [vmem:[#allocation8] sm:$0xff]
    %v69 = vld [vmem:[#allocation8 + $0x8] sm:$0xff]
    %v70 = vld [vmem:[#allocation8 + $0x10] sm:$0xff]
    %v71 = vld [vmem:[#allocation8 + $0x18] sm:$0xff]
    %v72 = vld [vmem:[#allocation2] sm:$0xff]
    %v73 = vunpack.c.0.s8 %v72
    %v74 = vunpack.c.1.s8 %v72
    %v75 = vunpack.c.2.s8 %v72
    %v76 = vunpack.c.3.s8 %v72
    %v77 = vcvt.s32.f32 %v73
    %v78 = vcvt.s32.f32 %v74
    %v79 = vcvt.s32.f32 %v75
    %v80 = vcvt.s32.f32 %v76
    %v81 = vpack.c.bf16 %v78, %v77
    %v82 = vpack.c.bf16 %v80, %v79
    %v83 = vld [vmem:[#allocation5] sm:$0xf]
    %v84 = vld [vmem:[#allocation5 + $0x4] sm:$0xf]
    %v85 = vld [vmem:[#allocation5 + $0x8] sm:$0xf]
    %v86 = vld [vmem:[#allocation5 + $0xc] sm:$0xf]
    %v87 = vld [vmem:[#allocation5 + $0x10] sm:$0xf]
    %v88 = vld [vmem:[#allocation5 + $0x14] sm:$0xf]
    %v89 = vld [vmem:[#allocation5 + $0x18] sm:$0xf]
    %v90 = vld [vmem:[#allocation5 + $0x1c] sm:$0xf]
    %v91 = vld [vmem:[#allocation5 + $0x20] sm:$0xf]
    %v92 = vld [vmem:[#allocation5 + $0x24] sm:$0xf]
    %v93 = vld [vmem:[#allocation5 + $0x28] sm:$0xf]
    %v94 = vld [vmem:[#allocation5 + $0x2c] sm:$0xf]
    %v95 = vld [vmem:[#allocation5 + $0x30] sm:$0xf]
    %v96 = vld [vmem:[#allocation5 + $0x34] sm:$0xf]
    %v97 = vld [vmem:[#allocation5 + $0x38] sm:$0xf]
    %v98 = vld [vmem:[#allocation5 + $0x3c] sm:$0xf]
    %v115 = vunpack.c.l.b16 %v83
    %v116 = vunpack.c.l.b16 %v84
    %v117 = vunpack.c.l.b16 %v85
    %v118 = vunpack.c.l.b16 %v86
    %v119 = vunpack.c.l.b16 %v87
    %v120 = vunpack.c.l.b16 %v88
    %v121 = vunpack.c.l.b16 %v89
    %v122 = vunpack.c.l.b16 %v90
    %v123 = vunpack.c.l.b16 %v91
    %v124 = vunpack.c.l.b16 %v92
    %v125 = vunpack.c.l.b16 %v93
    %v126 = vunpack.c.l.b16 %v94
    %v127 = vunpack.c.l.b16 %v95
    %v128 = vunpack.c.l.b16 %v96
    %v129 = vunpack.c.l.b16 %v97
    %v130 = vunpack.c.l.b16 %v98
    %v131 = vpack.c.b16 %v116, %v115
    %v132 = vpack.c.b16 %v118, %v117
    %v133 = vpack.c.b16 %v120, %v119
    %v134 = vpack.c.b16 %v122, %v121
    %v135 = vpack.c.b16 %v124, %v123
    %v136 = vpack.c.b16 %v126, %v125
    %v137 = vpack.c.b16 %v128, %v127
    %v138 = vpack.c.b16 %v130, %v129
    %147 = vmatpush.bf16.msra.mxu0 %v138
    %148 = vmatpush.bf16.msra.mxu0 %v137
    %149 = vmatpush.bf16.msra.mxu0 %v136
    %150 = vmatpush.bf16.msra.mxu0 %v135
    %151 = vmatpush.bf16.msra.mxu0 %v134
    %152 = vmatpush.bf16.msra.mxu0 %v133
    %153 = vmatpush.bf16.msra.mxu0 %v132
    %154 = vmatpush.bf16.msra.mxu0 %v131
    %155 = vmatmul.bf16.gmra.mxu0 %v81
    %v156 = vpop.f32.mrf.mxu0
    %v157 = vadd.f32 0.0, %v156
    %v158 = vpop.f32.mrf.mxu0
    %v159 = vadd.f32 0.0, %v158
    %160 = vmatmul.bf16.gmra.mxu0 %v82
    %v161 = vpop.f32.mrf.mxu0
    %v162 = vadd.f32 0.0, %v161
    %v163 = vpop.f32.mrf.mxu0
    %v164 = vadd.f32 0.0, %v163
    %165 = vdwg.mxu0
    %v166 = vadd.f32 %v68, %v157
    %v167 = vadd.f32 %v69, %v159
    %v168 = vadd.f32 %v70, %v162
    %v169 = vadd.f32 %v71, %v164
    %170 = vst [vmem:[#allocation8] sm:$0xff] %v166
    %171 = vst [vmem:[#allocation8 + $0x8] sm:$0xff] %v167
    %172 = vst [vmem:[#allocation8 + $0x10] sm:$0xff] %v168
    %173 = vst [vmem:[#allocation8 + $0x18] sm:$0xff] %v169
    // Predicated region
    $region30: #{tpu_custom_call.1} parent=1 // pred_check
      %p174 = pneg %p60
    $region31: #{tpu_custom_call.1} parent=1 // pred_check_branch
      %176 = sbr.rel (%p174) target = $region33
    $region32: #{tpu_custom_call.1} parent=1 // pred_region
      %v177 = vld [vmem:[#allocation8] sm:$0xff]
      %v178 = vld [vmem:[#allocation8 + $0x8] sm:$0xff]
      %v179 = vld [vmem:[#allocation8 + $0x10] sm:$0xff]
      %v180 = vld [vmem:[#allocation8 + $0x18] sm:$0xff]
      %v181 = vmax.f32 %v177, 0.0
      %v182 = vmax.f32 %v178, 0.0
      %v183 = vmax.f32 %v179, 0.0
      %v184 = vmax.f32 %v180, 0.0
      %v185 = vld [vmem:[#allocation7] sm:$0xf]
      %v186 = vld [vmem:[#allocation7 + $0x4] sm:$0xf]
      %v187 = vld [vmem:[#allocation7 + $0x8] sm:$0xf]
      %v188 = vld [vmem:[#allocation7 + $0xc] sm:$0xf]
      %v189 = vunpack.c.l.bf16 %v185
      %v190 = vunpack.c.l.bf16 %v186
      %v191 = vunpack.c.l.bf16 %v187
      %v192 = vunpack.c.l.bf16 %v188
      %v193 = vadd.f32 %v189, %v181
      %v194 = vadd.f32 %v190, %v182
      %v195 = vadd.f32 %v191, %v183
      %v196 = vadd.f32 %v192, %v184
      %197 = vst [vmem:[#allocation8] sm:$0xff] %v193
      %198 = vst [vmem:[#allocation8 + $0x8] sm:$0xff] %v194
      %199 = vst [vmem:[#allocation8 + $0x10] sm:$0xff] %v195
      %200 = vst [vmem:[#allocation8 + $0x18] sm:$0xff] %v196
    $region33: #{tpu_custom_call.1} parent=1 // pred_fallthru
      _
    // Predicated region
    $region34: #{tpu_custom_call.1} parent=1 // pred_check
      _
    $region35: #{tpu_custom_call.1} parent=1 // pred_check_branch
      %202 = sbr.rel (0) target = $region37
    $region36: #{tpu_custom_call.1} parent=1 // pred_region
      %204 = vsyncadd [#allocation4], 0
      %s205 = sshll.u32 [#allocation8], 4
      %s206 = int_to_ptr.vmem [resolvable:$true] %s205
      %s207 = sshll.u32 %s3, 4
      %s208 = int_to_ptr.hbm [resolvable:$true] %s207
      %213 = dma.vmem_to_hbm [thread:$0]  %s206, 512, %s208, [#allocation4], 128, 128, 8
    $region37: #{tpu_custom_call.1} parent=1 // pred_fallthru
      _
    // Predicated region
    $region38: #{tpu_custom_call.1} parent=1 // pred_check
      _
    $region39: #{tpu_custom_call.1} parent=1 // pred_check_branch
      %215 = sbr.rel (0) target = $region41
    $region40: #{tpu_custom_call.1} parent=1 // pred_region
      %217 = dma.done [#allocation4], 512
    $region41: #{tpu_custom_call.1} parent=1 // pred_fallthru
      _
    %218 = vsyncpa [#allocation3], 1
    %219 = vsyncpa [#allocation6], 1
    %220 = vsyncpa [#allocation4], 1

</llo_original>
